<compile_context>
chip_gen: v6e
topology: v6e:2x2x1
jax: 0.10.0
libtpu: 0.0.40
codegen_flags: <defaults>
</compile_context>

<pallas_src>
import functools

import jax
import jax.numpy as jnp
from jax.experimental import pallas as pl
from jax.experimental.pallas import tpu as pltpu


def _round_up(x, m):
    return ((x + m - 1) // m) * m


def _cross_entropy_kernel(n_true, tile_n, preds_ref, targets_ref, out_ref, acc_ref):
    """Partial-sum cross-entropy over one batch tile.

    preds_ref:   VMEM [tile_n, C] float (last grid block may be partial; OOB
                 rows hold unspecified data and are masked below)
    targets_ref: VMEM [tile_n, 1] int32 (class indices)
    out_ref:     SMEM [1, 1] float32 (written only at the last grid step)
    acc_ref:     SMEM [1] float32 running sum (persists across grid steps)
    """
    i = pl.program_id(0)

    @pl.when(i == 0)
    def _():
        acc_ref[0] = jnp.float32(0.0)

    # f32 compute path (required on v5e which has no bf16 VPU/EUP; also gives
    # a clean f32 accumulation everywhere).
    x = preds_ref[...].astype(jnp.float32)                # [tile_n, C]
    t = targets_ref[...]                                  # [tile_n, 1] int32

    # numerically stable per-row log-sum-exp; Mosaic masks physically padded
    # lanes (C not a multiple of 128) out of the max / sum reductions.
    m = jnp.max(x, axis=-1, keepdims=True)                # [tile_n, 1]
    lse = jnp.log(jnp.sum(jnp.exp(x - m), axis=-1, keepdims=True)) + m

    # gather the target logit without materializing an f32 one-hot temporary
    col = jax.lax.broadcasted_iota(jnp.int32, x.shape, dimension=1)
    tgt_logit = jnp.sum(jnp.where(col == t, x, 0.0), axis=-1, keepdims=True)

    loss = lse - tgt_logit                                # [tile_n, 1]

    # mask rows of the (possibly partial) last block that lie past the true N
    row = jax.lax.broadcasted_iota(jnp.int32, loss.shape, dimension=0) + i * tile_n
    loss = jnp.where(row < n_true, loss, 0.0)

    acc_ref[0] += jnp.sum(loss)

    @pl.when(i == pl.num_programs(0) - 1)
    def _():
        out_ref[0, 0] = acc_ref[0] / jnp.float32(n_true)


@jax.jit
def cross_entropy_loss(preds, targets):
    """preds: [N, C] float, targets: [N] int -> scalar f32 (mean reduction)."""
    n, c = preds.shape
    itemsize = jnp.dtype(preds.dtype).itemsize

    # physical lane width used only for VMEM-budget arithmetic
    c_phys = _round_up(max(c, 128), 128)

    # batch tile: big enough to pipeline well, small enough that each f32
    # working copy stays ~<= 4 MiB regardless of class width (v5e/v6e/v7x safe).
    budget_rows = max(8, (4 * 1024 * 1024) // (c_phys * 4))
    tile_n = max(8, min(1024, (budget_rows // 8) * 8))
    tile_n = min(tile_n, _round_up(n, 8))
    num_tiles = (n + tile_n - 1) // tile_n

    # targets as a lane-1 column so the block obeys the (8,128)/full-dim rule
    targets2d = targets.astype(jnp.int32).reshape(n, 1)

    # double-buffered input tiles + a few f32 working copies + headroom
    vmem_limit = int(min(48 * 1024 * 1024,
                         max(8 * 1024 * 1024,
                             2 * tile_n * c_phys * itemsize
                             + 6 * tile_n * c_phys * 4)))

    kernel = functools.partial(_cross_entropy_kernel, n, tile_n)
    out = pl.pallas_call(
        kernel,
        out_shape=jax.ShapeDtypeStruct((1, 1), jnp.float32),
        grid_spec=pltpu.PrefetchScalarGridSpec(
            num_scalar_prefetch=0,
            grid=(num_tiles,),
            in_specs=[
                pl.BlockSpec((tile_n, c), lambda i: (i, 0)),
                pl.BlockSpec((tile_n, 1), lambda i: (i, 0)),
            ],
            out_specs=pl.BlockSpec(memory_space=pltpu.SMEM),
            scratch_shapes=[pltpu.SMEM((1,), jnp.float32)],
        ),
        compiler_params=pltpu.CompilerParams(
            dimension_semantics=("arbitrary",),
            vmem_limit_bytes=vmem_limit,
        ),
    )(preds, targets2d)
    return out[0, 0]


class CriterionPallas:
    """JAX/Pallas port of Criterion (default config: plain cross-entropy base,
    no extra losses)."""

    def __init__(self, name=None, mixup_fn=None, label_smoothing=0.0,
                 is_focal=False, extra_losses=(), is_train=True):
        # Resolve base criterion name exactly like build_criterion.
        if name is None:
            if mixup_fn is not None:
                name = 'soft_label_cross_entropy'
            elif label_smoothing > 0.0:
                name = 'label_smooth_cross_entropy'
            else:
                name = 'cross_entropy'
            if is_focal:
                name = 'focal'
        if name != 'cross_entropy':
            # TODO(synk): only the 'cross_entropy' base criterion is ported to Pallas.
            raise NotImplementedError(f'{name} base criterion not ported')
        self.name = name
        self.criterion = cross_entropy_loss
        if extra_losses:
            # TODO(synk): TverskyLoss / FocalLoss extras not ported (external deps in source).
            raise NotImplementedError('extra losses not ported')
        self.extra_losses = {}
        self.loss_weights = {'cls': 1.0, 'iou': 1.0}

    def __call__(self, losses_dict):
        losses = {}
        base_losses = [k for k in losses_dict.keys() if 'base' in k]
        for k in base_losses:
            values = losses_dict[k]
            losses[k] = self.criterion(values['preds'], values['targets'])
        for k in self.extra_losses:
            values = losses_dict[k]
            losses[k] = self.extra_losses[k](values['preds'], values['targets'])
        all_loss = jnp.float32(0.0)
        for k, v in losses.items():
            all_loss = all_loss + v * self.loss_weights.get(k, 1.0)
        return all_loss


if __name__ == "__main__":
    key = jax.random.PRNGKey(0)
    k1, k2, k3, k4 = jax.random.split(key, 4)

    # small shapes; exercises both the clean case and the masked partial-block
    # + non-lane-aligned-class case.
    Na, Ca = 8, 32     # clean case (block == array)
    Nb, Cb = 13, 40    # partial batch block (N % 8 != 0) and C % 128 != 0

    preds_a = jax.random.normal(k1, (Na, Ca), dtype=jnp.float32)
    targets_a = jax.random.randint(k2, (Na,), 0, Ca, dtype=jnp.int32)
    preds_b = jax.random.normal(k3, (Nb, Cb), dtype=jnp.float32)
    targets_b = jax.random.randint(k4, (Nb,), 0, Cb, dtype=jnp.int32)

    losses_dict = {
        'base': {'preds': preds_a, 'targets': targets_a},
        'base_aux': {'preds': preds_b, 'targets': targets_b},
    }

    criterion = CriterionPallas(name=None, mixup_fn=None, label_smoothing=0.0)
    total = criterion(losses_dict)
    total = jax.block_until_ready(total)

    # reference check (plain JAX log-softmax cross-entropy, mean reduction)
    def ref_ce(p, t):
        lp = jax.nn.log_softmax(p.astype(jnp.float32), axis=-1)
        return -jnp.mean(lp[jnp.arange(p.shape[0]), t])

    ref = ref_ce(preds_a, targets_a) + ref_ce(preds_b, targets_b)
    assert jnp.allclose(total, ref, rtol=1e-5, atol=1e-5), (total, ref)

    print("KERNEL_OK")
</pallas_src>

<mosaic_0001>
module attributes {stable_mosaic.version = 11 : i64} {
  func.func @_cross_entropy_kernel(%arg0: i32, %arg1: memref<8x32xf32, #tpu.memory_space<vmem>>, %arg2: memref<8x1xi32, #tpu.memory_space<vmem>>, %arg3: memref<1x1xf32, #tpu.memory_space<smem>>, %arg4: memref<1xf32, #tpu.memory_space<smem>>) attributes {dimension_semantics = [#tpu.dimension_semantics<arbitrary>], iteration_bounds = array<i64: 1>, scalar_prefetch = 0 : i64, scratch_operands = 1 : i64, tpu.core_type = #tpu.core_type<tc>, window_params = [{transform_indices = @transform_0, window_bounds = array<i64: 8, 32>}, {transform_indices = @transform_1, window_bounds = array<i64: 8, 1>}, {transform_indices = @transform_2, window_bounds = array<i64: 1, 1>}]} {
    %c0_i32 = arith.constant 0 : i32
    %0 = arith.cmpi eq, %arg0, %c0_i32 : i32
    %1 = arith.extui %0 : i1 to i32
    %c0_i32_0 = arith.constant 0 : i32
    %2 = arith.cmpi ne, %1, %c0_i32_0 : i32
    scf.if %2 {
      %cst_14 = arith.constant 0.000000e+00 : f32
      %c0_15 = arith.constant 0 : index
      %40 = memref.load %arg4[%c0_15] : memref<1xf32, #tpu.memory_space<smem>>
      memref.store %cst_14, %arg4[%c0_15] : memref<1xf32, #tpu.memory_space<smem>>
    } else {
    }
    %c0 = arith.constant 0 : index
    %c0_1 = arith.constant 0 : index
    %3 = vector.load %arg1[%c0, %c0_1] : memref<8x32xf32, #tpu.memory_space<vmem>>, vector<8x32xf32>
    %c0_2 = arith.constant 0 : index
    %c0_3 = arith.constant 0 : index
    %4 = vector.load %arg2[%c0_2, %c0_3] : memref<8x1xi32, #tpu.memory_space<vmem>>, vector<8x1xi32>
    %cst = arith.constant dense<0xFF800000> : vector<8xf32>
    %5 = vector.multi_reduction <maximumf>, %3, %cst [1] : vector<8x32xf32> to vector<8xf32>
    %6 = vector.shape_cast %5 : vector<8xf32> to vector<8x1xf32>
    %7 = vector.broadcast %6 : vector<8x1xf32> to vector<8x32xf32>
    %8 = arith.subf %3, %7 : vector<8x32xf32>
    %9 = math.exp %8 : vector<8x32xf32>
    %cst_4 = arith.constant dense<0.000000e+00> : vector<8xf32>
    %10 = vector.multi_reduction <add>, %9, %cst_4 [1] : vector<8x32xf32> to vector<8xf32>
    %11 = vector.shape_cast %10 : vector<8xf32> to vector<8x1xf32>
    %12 = math.log %11 : vector<8x1xf32>
    %13 = arith.addf %12, %6 : vector<8x1xf32>
    %14 = tpu.iota {dimensions = array<i32: 1>} : vector<8x32xi32>
    %15 = vector.broadcast %4 : vector<8x1xi32> to vector<8x32xi32>
    %16 = arith.cmpi eq, %14, %15 : vector<8x32xi32>
    %cst_5 = arith.constant 0.000000e+00 : f32
    %17 = vector.broadcast %cst_5 : f32 to vector<8x32xf32>
    %18 = arith.select %16, %3, %17 : vector<8x32xi1>, vector<8x32xf32>
    %cst_6 = arith.constant dense<0.000000e+00> : vector<8xf32>
    %19 = vector.multi_reduction <add>, %18, %cst_6 [1] : vector<8x32xf32> to vector<8xf32>
    %20 = vector.shape_cast %19 : vector<8xf32> to vector<8x1xf32>
    %21 = arith.subf %13, %20 : vector<8x1xf32>
    %22 = tpu.iota {dimensions = array<i32: 0>} : vector<8x1xi32>
    %c8_i32 = arith.constant 8 : i32
    %23 = arith.muli %arg0, %c8_i32 : i32
    %24 = vector.broadcast %23 : i32 to vector<8x1xi32>
    %25 = arith.addi %22, %24 : vector<8x1xi32>
    %c8_i32_7 = arith.constant 8 : i32
    %26 = vector.broadcast %c8_i32_7 : i32 to vector<8x1xi32>
    %27 = arith.cmpi slt, %25, %26 : vector<8x1xi32>
    %cst_8 = arith.constant 0.000000e+00 : f32
    %28 = vector.broadcast %cst_8 : f32 to vector<8x1xf32>
    %29 = arith.select %27, %21, %28 : vector<8x1xi1>, vector<8x1xf32>
    %c0_9 = arith.constant 0 : index
    %30 = memref.load %arg4[%c0_9] : memref<1xf32, #tpu.memory_space<smem>>
    %31 = vector.shape_cast %29 : vector<8x1xf32> to vector<1x8x1xf32>
    %cst_10 = arith.constant dense<0.000000e+00> : vector<1xf32>
    %32 = vector.multi_reduction <add>, %31, %cst_10 [1, 2] : vector<1x8x1xf32> to vector<1xf32>
    %33 = vector.shape_cast %32 : vector<1xf32> to vector<1x1x1xf32>
    %34 = vector.extract %33[0, 0, 0] : f32 from vector<1x1x1xf32>
    %35 = arith.addf %30, %34 : f32
    %c0_11 = arith.constant 0 : index
    %36 = memref.load %arg4[%c0_11] : memref<1xf32, #tpu.memory_space<smem>>
    memref.store %35, %arg4[%c0_11] : memref<1xf32, #tpu.memory_space<smem>>
    %c0_i32_12 = arith.constant 0 : i32
    %37 = arith.cmpi eq, %arg0, %c0_i32_12 : i32
    %38 = arith.extui %37 : i1 to i32
    %c0_i32_13 = arith.constant 0 : i32
    %39 = arith.cmpi ne, %38, %c0_i32_13 : i32
    scf.if %39 {
      %c0_14 = arith.constant 0 : index
      %40 = memref.load %arg4[%c0_14] : memref<1xf32, #tpu.memory_space<smem>>
      %cst_15 = arith.constant 8.000000e+00 : f32
      %41 = arith.divf %40, %cst_15 : f32
      %c0_16 = arith.constant 0 : index
      %c0_17 = arith.constant 0 : index
      %42 = memref.load %arg3[%c0_16, %c0_17] : memref<1x1xf32, #tpu.memory_space<smem>>
      memref.store %41, %arg3[%c0_16, %c0_17] : memref<1x1xf32, #tpu.memory_space<smem>>
    } else {
    }
    return
  }
  func.func @transform_0(%arg0: i32) -> (i32, i32) {
    %c0_i32 = arith.constant 0 : i32
    %c0_i32_0 = arith.constant 0 : i32
    return %arg0, %c0_i32 : i32, i32
  }
  func.func @transform_1(%arg0: i32) -> (i32, i32) {
    %c0_i32 = arith.constant 0 : i32
    %c0_i32_0 = arith.constant 0 : i32
    return %arg0, %c0_i32 : i32, i32
  }
  func.func @transform_2(%arg0: i32) -> (i32, i32) {
    %c0_i32 = arith.constant 0 : i32
    %c0_i32_0 = arith.constant 0 : i32
    %c0_i32_1 = arith.constant 0 : i32
    return %c0_i32, %c0_i32_0 : i32, i32
  }
}

</mosaic_0001>

<llo_original>
// kernel: cross_entropy_loss.1
$region0: #{cross_entropy_loss.1}
  #allocation0 [shape = 'u32[]', space=smem, size = 0x4, offset = 0x4, fixed_abs, tag = 'smem constant byte address 0x4 - core index']
  #allocation1 [shape = 'u32[144,128]{1,0:T(1,128)}', space=vmem, size = 0x12000, scoped, tag = 'internal scratch']
  #allocation2 [shape = 'f32[1]{0:T(128)}', space=smem, size = 0x200, scoped, tag = 'scratch operand']
  %s0 = inlined_call_operand.vmem [shape: f32[8,32], index: 0, kind: input, shape index: {}]
  %s1 = inlined_call_operand.vmem [shape: s32[8,1], index: 1, kind: input, shape index: {}]
  %s2 = inlined_call_operand.hbm [shape: f32[1,1], index: 2, kind: output, shape index: {}]
  %s3 = sld [smem:[#allocation0]]
  $region26: #{cross_entropy_loss.1} parent=0
    _
  %s5 = ssub.s32 1, %s3
  %s6 = scalar_select 0, %s5, %s3
  $region1: #{cross_entropy_loss.1} parent=0
    #allocation3 [shape = 'u8[512]{0}', space=smem, size = 0x200, scoped, tag = 'output window, operand 0, single buffered']
    #allocation4 [shape = 's32[1]{0}', space=sflag, size = 0x4, scoped, tag = 'scoped memory for cross_entropy_loss.1']
    %7 = vsyncpa [#allocation4], 0
    // Predicated region
    $region2: #{cross_entropy_loss.1} parent=1 // pred_check
      _
    $region3: #{cross_entropy_loss.1} parent=1 // pred_check_branch
      %9 = sbr.rel (0) target = $region5
    $region4: #{cross_entropy_loss.1} parent=1 // pred_region
      _
    $region5: #{cross_entropy_loss.1} parent=1 // pred_fallthru
      _
    // Predicated region
    $region6: #{cross_entropy_loss.1} parent=1 // pred_check
      _
    $region7: #{cross_entropy_loss.1} parent=1 // pred_check_branch
      %11 = sbr.rel (0) target = $region9
    $region8: #{cross_entropy_loss.1} parent=1 // pred_region
      _
    $region9: #{cross_entropy_loss.1} parent=1 // pred_fallthru
      _
    %p12 = scmp.eq.s32.totalorder 0, 0
    // Predicated region
    $region10: #{cross_entropy_loss.1} parent=1 // pred_check
      %p13 = pneg %p12
    $region11: #{cross_entropy_loss.1} parent=1 // pred_check_branch
      %15 = sbr.rel (%p13) target = $region13
    $region12: #{cross_entropy_loss.1} parent=1 // pred_region
      %s16 = scalar_lea.smem [#allocation2], 0
      %17 = sst [smem:[%s16]] 0.0
    $region13: #{cross_entropy_loss.1} parent=1 // pred_fallthru
      _
    %v18 = vld [vmem:[%s0] sm:$0xff]
    %v19 = vld [vmem:[%s1] sm:$0xff]
    %vm20 = vcmask 261120
    %v21 = vsel %vm20, %v18, -inf
    %22 = vmax.xlane.f32.xlu0 %v21
    %v23 = vpop.xlane.xlu0 %22
    %v24 = vsub.f32 %v18, %v23
    %v25 = vmul.f32 %v24, 1.442695
    %v26 = vpow.pop %v25
    %v27 = vsel %vm20, %v26, 0.0
    %28 = vadd.xlane.f32.xlu0 %v27
    %v29 = vpop.xlane.xlu0 %28
    %v30 = vlog2.pop %v29
    %v31 = vmul.f32 %v30, 0.6931472
    %v32 = vadd.f32 %v31, %v23
    %v33 = vlaneseq
    %v34 = vand.u32 %v33, 127
    %35 = vset.pattern.permute.xlu0 0
    %36 = vperm.xlu0 %35, %v19
    %v37 = vpop.permute.xlu0 %36
    %vm38 = vcmp.eq.s32.totalorder %v34, %v37
    %v39 = vsel %vm38, %v18, 0.0
    %v40 = vsel %vm20, %v39, 0.0
    %41 = vadd.xlane.f32.xlu0 %v40
    %v42 = vpop.xlane.xlu0 %41
    %v43 = vsub.f32 %v32, %v42
    %v44 = vlaneseq
    %v45 = vshrl.u32 %v44, 7
    %s46 = smul.u32 0, 8
    %v47 = vstv %s46
    %v48 = vadd.s32 %v45, %v47
    %vm49 = vcmp.lt.s32.totalorder %v48, 8
    %v50 = vsel %vm49, %v43, 0.0
    %s51 = sld [smem:[#allocation2]]
    %vm52 = vcmask 7168
    %v53 = vsel %vm52, %v50, 0.0
    %54 = vadd.xlane.f32.xlu0 %v53
    %v55 = vpop.xlane.xlu0 %54
    %v56 = vrot.slane %v55, 4
    %v57 = vadd.f32 %v55, %v56
    %v58 = vrot.slane %v57, 2
    %v59 = vadd.f32 %v57, %v58
    %v60 = vrot.slane %v59, 1
    %v61 = vadd.f32 %v59, %v60
    %s62 = vtos %v61
    %s63 = sadd.f32 %s51, %s62
    %s64 = scalar_lea.smem [#allocation2], 0
    %65 = sst [smem:[%s64]] %s63
    // Predicated region
    $region14: #{cross_entropy_loss.1} parent=1 // pred_check
      %p66 = pneg %p12
    $region15: #{cross_entropy_loss.1} parent=1 // pred_check_branch
      %68 = sbr.rel (%p66) target = $region17
    $region16: #{cross_entropy_loss.1} parent=1 // pred_region
      %s69 = sld [smem:[#allocation2]]
      %v70 = vrcp.pop 8.0
      %s71 = vtos %v70
      %s72 = smul.f32 %s69, %s71
      %s73 = scalar_lea.smem [#allocation3], 0
      %74 = sst [smem:[%s73]] %s72
    $region17: #{cross_entropy_loss.1} parent=1 // pred_fallthru
      _
    // Predicated region
    $region18: #{cross_entropy_loss.1} parent=1 // pred_check
      _
    $region19: #{cross_entropy_loss.1} parent=1 // pred_check_branch
      %76 = sbr.rel (0) target = $region21
    $region20: #{cross_entropy_loss.1} parent=1 // pred_region
      %s78 = ssub.s32 16, 16
      %79 = vsyncadd [#allocation4], %s78
      %82 = dma.smem_to_hbm [#allocation3], 16, %s2, [#allocation4]
    $region21: #{cross_entropy_loss.1} parent=1 // pred_fallthru
      _
    // Predicated region
    $region22: #{cross_entropy_loss.1} parent=1 // pred_check
      _
    $region23: #{cross_entropy_loss.1} parent=1 // pred_check_branch
      %84 = sbr.rel (0) target = $region25
    $region24: #{cross_entropy_loss.1} parent=1 // pred_region
      %85 = dma.done [#allocation4], 16
    $region25: #{cross_entropy_loss.1} parent=1 // pred_fallthru
      _
    %86 = sfence
    %87 = vsyncpa [#allocation4], 1

</llo_original>
